<compile_context>
chip_gen: v6e
topology: v6e:2x2x1
jax: 0.10.0
libtpu: 0.0.40
codegen_flags: <defaults>
</compile_context>

<pallas_src>
import functools

import jax
import jax.numpy as jnp
from jax.experimental import pallas as pl
from jax.experimental.pallas import tpu as pltpu


def _fam_kernel(x_ref, w_ref, b3_ref, b1_ref, o_ref, *, C, H, W, NB):
    # x_ref : (NB, C, H*W) f32   NB batch elements, spatial flattened on lanes
    # w_ref : (2C, 9C)     bf16  fused [conv3 ; conv1] weights, col = tap*C + cin
    # b3_ref: (C, 1) f32,  b1_ref: (C, 1) f32
    # o_ref : (NB, C, H*W) f32
    HW = H * W

    # ---- border masks: built once, shared by every tap and every image ----
    p = jax.lax.broadcasted_iota(jnp.int32, (1, HW), 1)   # local flat position
    if (W & (W - 1)) == 0:
        col = p & (W - 1)
    else:
        col = p - (p // W) * W
    top_ok = p >= W                    # h - 1 >= 0
    bot_ok = p < (H - 1) * W           # h + 1 <= H - 1
    left_ok = col >= 1                 # w - 1 >= 0
    right_ok = col < (W - 1)           # w + 1 <= W - 1

    tap_masks = []
    for ky in range(3):
        for kx in range(3):
            m = None
            if ky == 0:
                m = top_ok
            elif ky == 2:
                m = bot_ok
            if kx == 0:
                m = left_ok if m is None else (m & left_ok)
            elif kx == 2:
                m = right_ok if m is None else (m & right_ok)
            tap_masks.append(m)

    # ---- im2col operand (9C, NB*HW) bf16, built in registers (no scratch) ----
    per_image = []
    for b in range(NB):
        x_b = x_ref[b]                                         # (C, HW) f32
        taps = []
        for ky in range(3):
            dy = ky - 1
            for kx in range(3):
                dx = kx - 1
                off = dy * W + dx
                # shifted[:, q] = x[:, q + off]; wrapped lanes masked to zero.
                shifted = x_b if off == 0 else jnp.roll(x_b, -off, axis=1)
                m = tap_masks[ky * 3 + kx]
                if m is not None:
                    shifted = jnp.where(m, shifted, 0.0)       # f32 math (v5e)
                taps.append(shifted.astype(jnp.bfloat16))      # pack at the end
        per_image.append(jnp.concatenate(taps, axis=0))        # (9C, HW) bf16
    stacked = (per_image[0] if NB == 1
               else jnp.concatenate(per_image, axis=1))        # (9C, NB*HW)

    # ---- one fused MXU push: (2C, 9C) @ (9C, NB*HW), f32 accumulation ----
    res = jnp.dot(w_ref[...], stacked,
                  preferred_element_type=jnp.float32)          # (2C, NB*HW)

    # ---- epilogue in f32: bias + ReLU per branch, then sum ----
    x3 = jnp.maximum(res[:C, :] + b3_ref[...], 0.0)
    x1 = jnp.maximum(res[C:, :] + b1_ref[...], 0.0)
    out = (x3 + x1).astype(o_ref.dtype)                        # (C, NB*HW)

    for b in range(NB):                                        # lane-dense stores
        o_ref[b] = out[:, b * HW:(b + 1) * HW]


def fam_block(x_nchw, w3, b3, w1, b1, *, batch_block=None):
    """FAMBlock forward: relu(conv3x3(x)+b3) + relu(conv1x1(x)+b1).

    x_nchw: (N, C, H, W)
    w3: (C, C, 3, 3), b3: (C,)   -- 3x3 conv, padding=1
    w1: (C, C, 1, 1), b1: (C,)   -- 1x1 conv
    batch_block: images folded per grid step.  Default: whole batch when N<=4
      (best on single-TC v5e/v6e); cdiv(N,2) for larger N so a 2-way
      "parallel" grid can feed both v7x TensorCores.
    """
    N, C, H, W = x_nchw.shape
    HW = H * W

    if batch_block is None:
        batch_block = N if N <= 4 else pl.cdiv(N, 2)
    NB = max(1, min(int(batch_block), N))
    G = pl.cdiv(N, NB)

    x_flat = x_nchw.reshape(N, C, HW)          # free reshape: NCHW contiguous

    # Fused weight (2C, 9C):
    #   rows [0, C)  -> conv3 out channels, cols = (ky*3+kx)*C + cin
    #   rows [C, 2C) -> conv1 out channels, only centre-tap (tap=4) cols set
    w3_rows = jnp.transpose(w3, (0, 2, 3, 1)).reshape(C, 9 * C)
    w1_rows = jnp.zeros((C, 9 * C), dtype=w1.dtype)
    w1_rows = w1_rows.at[:, 4 * C:5 * C].set(w1[:, :, 0, 0])
    w_all = jnp.concatenate([w3_rows, w1_rows], axis=0).astype(jnp.bfloat16)

    b3_col = b3.reshape(C, 1).astype(jnp.float32)
    b1_col = b1.reshape(C, 1).astype(jnp.float32)

    kernel = functools.partial(_fam_kernel, C=C, H=H, W=W, NB=NB)

    out_flat = pl.pallas_call(
        kernel,
        out_shape=jax.ShapeDtypeStruct((N, C, HW), x_nchw.dtype),
        grid_spec=pltpu.PrefetchScalarGridSpec(
            num_scalar_prefetch=0,
            grid=(G,),
            in_specs=[
                pl.BlockSpec((NB, C, HW), lambda g: (g, 0, 0)),
                pl.BlockSpec((2 * C, 9 * C), lambda g: (0, 0)),
                pl.BlockSpec((C, 1), lambda g: (0, 0)),
                pl.BlockSpec((C, 1), lambda g: (0, 0)),
            ],
            out_specs=pl.BlockSpec((NB, C, HW), lambda g: (g, 0, 0)),
        ),
        compiler_params=pltpu.CompilerParams(
            dimension_semantics=("parallel",)),
    )(x_flat, w_all, b3_col, b1_col)

    return out_flat.reshape(N, C, H, W)


def _reference(x_nchw, w3, b3, w1, b1):
    # Pure-JAX f32 reference (NCHW conv) for correctness checking.
    dn = jax.lax.conv_dimension_numbers(x_nchw.shape, w3.shape,
                                        ("NCHW", "OIHW", "NCHW"))
    y3 = jax.lax.conv_general_dilated(x_nchw, w3, (1, 1), ((1, 1), (1, 1)),
                                      dimension_numbers=dn)
    y3 = jnp.maximum(y3 + b3.reshape(1, -1, 1, 1), 0.0)
    y1 = jax.lax.conv_general_dilated(x_nchw, w1, (1, 1), ((0, 0), (0, 0)),
                                      dimension_numbers=dn)
    y1 = jnp.maximum(y1 + b1.reshape(1, -1, 1, 1), 0.0)
    return y3 + y1


if __name__ == "__main__":
    N, C, H, W = 2, 4, 16, 16
    key = jax.random.PRNGKey(0)
    kx_, k3w, k3b, k1w, k1b = jax.random.split(key, 5)

    x = jax.random.normal(kx_, (N, C, H, W), dtype=jnp.float32)
    # Deterministic synthetic parameters (same shapes as nn.Conv2d weights).
    w3 = jax.random.normal(k3w, (C, C, 3, 3), dtype=jnp.float32) * 0.1
    b3 = jax.random.normal(k3b, (C,), dtype=jnp.float32) * 0.1
    w1 = jax.random.normal(k1w, (C, C, 1, 1), dtype=jnp.float32) * 0.1
    b1 = jax.random.normal(k1b, (C,), dtype=jnp.float32) * 0.1

    out = jax.block_until_ready(fam_block(x, w3, b3, w1, b1))
    ref = jax.block_until_ready(_reference(x, w3, b3, w1, b1))

    assert out.shape == (N, C, H, W)
    # bf16 MXU operands (f32 accumulation / epilogue) -> bf16-level tolerance.
    assert jnp.allclose(out, ref, atol=3e-2, rtol=3e-2), \
        float(jnp.max(jnp.abs(out - ref)))

    print("KERNEL_OK")
</pallas_src>

<mosaic_0001>
module attributes {stable_mosaic.version = 11 : i64} {
  func.func @_fam_kernel(%arg0: i32, %arg1: memref<2x4x256xf32, #tpu.memory_space<vmem>>, %arg2: memref<8x36xbf16, #tpu.memory_space<vmem>>, %arg3: memref<4x1xf32, #tpu.memory_space<vmem>>, %arg4: memref<4x1xf32, #tpu.memory_space<vmem>>, %arg5: memref<2x4x256xf32, #tpu.memory_space<vmem>>) attributes {dimension_semantics = [#tpu.dimension_semantics<parallel>], iteration_bounds = array<i64: 1>, scalar_prefetch = 0 : i64, scratch_operands = 0 : i64, tpu.core_type = #tpu.core_type<tc>, window_params = [{transform_indices = @transform_0, window_bounds = array<i64: 2, 4, 256>}, {pipeline_mode = #tpu.pipeline_mode<synchronous>, transform_indices = @transform_1, window_bounds = array<i64: 8, 36>}, {pipeline_mode = #tpu.pipeline_mode<synchronous>, transform_indices = @transform_2, window_bounds = array<i64: 4, 1>}, {pipeline_mode = #tpu.pipeline_mode<synchronous>, transform_indices = @transform_3, window_bounds = array<i64: 4, 1>}, {transform_indices = @transform_4, window_bounds = array<i64: 2, 4, 256>}]} {
    %0 = tpu.iota {dimensions = array<i32: 1>} : vector<1x256xi32>
    %c15_i32 = arith.constant 15 : i32
    %1 = vector.broadcast %c15_i32 : i32 to vector<1x256xi32>
    %2 = arith.andi %0, %1 : vector<1x256xi32>
    %c16_i32 = arith.constant 16 : i32
    %3 = vector.broadcast %c16_i32 : i32 to vector<1x256xi32>
    %4 = arith.cmpi sge, %0, %3 : vector<1x256xi32>
    %c240_i32 = arith.constant 240 : i32
    %5 = vector.broadcast %c240_i32 : i32 to vector<1x256xi32>
    %6 = arith.cmpi slt, %0, %5 : vector<1x256xi32>
    %c1_i32 = arith.constant 1 : i32
    %7 = vector.broadcast %c1_i32 : i32 to vector<1x256xi32>
    %8 = arith.cmpi sge, %2, %7 : vector<1x256xi32>
    %c15_i32_0 = arith.constant 15 : i32
    %9 = vector.broadcast %c15_i32_0 : i32 to vector<1x256xi32>
    %10 = arith.cmpi slt, %2, %9 : vector<1x256xi32>
    %11 = arith.andi %4, %8 : vector<1x256xi1>
    %12 = arith.andi %4, %10 : vector<1x256xi1>
    %13 = arith.andi %6, %8 : vector<1x256xi1>
    %14 = arith.andi %6, %10 : vector<1x256xi1>
    %c0 = arith.constant 0 : index
    %c0_1 = arith.constant 0 : index
    %c0_2 = arith.constant 0 : index
    %15 = vector.load %arg1[%c0, %c0_1, %c0_2] : memref<2x4x256xf32, #tpu.memory_space<vmem>>, vector<1x4x256xf32>
    %16 = vector.shape_cast %15 : vector<1x4x256xf32> to vector<4x256xf32>
    %17 = vector.extract_strided_slice %16 {offsets = [0, 239], sizes = [4, 17], strides = [1, 1]} : vector<4x256xf32> to vector<4x17xf32>
    %18 = vector.extract_strided_slice %16 {offsets = [0, 0], sizes = [4, 239], strides = [1, 1]} : vector<4x256xf32> to vector<4x239xf32>
    %19 = tpu.concatenate %17, %18 in 1 : vector<4x17xf32>, vector<4x239xf32> -> vector<4x256xf32>
    %cst = arith.constant 0.000000e+00 : f32
    %20 = vector.shape_cast %11 : vector<1x256xi1> to vector<1x256xi1>
    %21 = vector.broadcast %20 : vector<1x256xi1> to vector<4x256xi1>
    %22 = vector.broadcast %cst : f32 to vector<4x256xf32>
    %23 = arith.select %21, %19, %22 : vector<4x256xi1>, vector<4x256xf32>
    %24 = arith.truncf %23 : vector<4x256xf32> to vector<4x256xbf16>
    %25 = vector.extract_strided_slice %16 {offsets = [0, 240], sizes = [4, 16], strides = [1, 1]} : vector<4x256xf32> to vector<4x16xf32>
    %26 = vector.extract_strided_slice %16 {offsets = [0, 0], sizes = [4, 240], strides = [1, 1]} : vector<4x256xf32> to vector<4x240xf32>
    %27 = tpu.concatenate %25, %26 in 1 : vector<4x16xf32>, vector<4x240xf32> -> vector<4x256xf32>
    %cst_3 = arith.constant 0.000000e+00 : f32
    %28 = vector.shape_cast %4 : vector<1x256xi1> to vector<1x256xi1>
    %29 = vector.broadcast %28 : vector<1x256xi1> to vector<4x256xi1>
    %30 = vector.broadcast %cst_3 : f32 to vector<4x256xf32>
    %31 = arith.select %29, %27, %30 : vector<4x256xi1>, vector<4x256xf32>
    %32 = arith.truncf %31 : vector<4x256xf32> to vector<4x256xbf16>
    %33 = vector.extract_strided_slice %16 {offsets = [0, 241], sizes = [4, 15], strides = [1, 1]} : vector<4x256xf32> to vector<4x15xf32>
    %34 = vector.extract_strided_slice %16 {offsets = [0, 0], sizes = [4, 241], strides = [1, 1]} : vector<4x256xf32> to vector<4x241xf32>
    %35 = tpu.concatenate %33, %34 in 1 : vector<4x15xf32>, vector<4x241xf32> -> vector<4x256xf32>
    %cst_4 = arith.constant 0.000000e+00 : f32
    %36 = vector.shape_cast %12 : vector<1x256xi1> to vector<1x256xi1>
    %37 = vector.broadcast %36 : vector<1x256xi1> to vector<4x256xi1>
    %38 = vector.broadcast %cst_4 : f32 to vector<4x256xf32>
    %39 = arith.select %37, %35, %38 : vector<4x256xi1>, vector<4x256xf32>
    %40 = arith.truncf %39 : vector<4x256xf32> to vector<4x256xbf16>
    %41 = vector.extract_strided_slice %16 {offsets = [0, 255], sizes = [4, 1], strides = [1, 1]} : vector<4x256xf32> to vector<4x1xf32>
    %42 = vector.extract_strided_slice %16 {offsets = [0, 0], sizes = [4, 255], strides = [1, 1]} : vector<4x256xf32> to vector<4x255xf32>
    %43 = tpu.concatenate %41, %42 in 1 : vector<4x1xf32>, vector<4x255xf32> -> vector<4x256xf32>
    %cst_5 = arith.constant 0.000000e+00 : f32
    %44 = vector.shape_cast %8 : vector<1x256xi1> to vector<1x256xi1>
    %45 = vector.broadcast %44 : vector<1x256xi1> to vector<4x256xi1>
    %46 = vector.broadcast %cst_5 : f32 to vector<4x256xf32>
    %47 = arith.select %45, %43, %46 : vector<4x256xi1>, vector<4x256xf32>
    %48 = arith.truncf %47 : vector<4x256xf32> to vector<4x256xbf16>
    %49 = arith.truncf %16 : vector<4x256xf32> to vector<4x256xbf16>
    %50 = vector.extract_strided_slice %16 {offsets = [0, 1], sizes = [4, 255], strides = [1, 1]} : vector<4x256xf32> to vector<4x255xf32>
    %51 = vector.extract_strided_slice %16 {offsets = [0, 0], sizes = [4, 1], strides = [1, 1]} : vector<4x256xf32> to vector<4x1xf32>
    %52 = tpu.concatenate %50, %51 in 1 : vector<4x255xf32>, vector<4x1xf32> -> vector<4x256xf32>
    %cst_6 = arith.constant 0.000000e+00 : f32
    %53 = vector.shape_cast %10 : vector<1x256xi1> to vector<1x256xi1>
    %54 = vector.broadcast %53 : vector<1x256xi1> to vector<4x256xi1>
    %55 = vector.broadcast %cst_6 : f32 to vector<4x256xf32>
    %56 = arith.select %54, %52, %55 : vector<4x256xi1>, vector<4x256xf32>
    %57 = arith.truncf %56 : vector<4x256xf32> to vector<4x256xbf16>
    %58 = vector.extract_strided_slice %16 {offsets = [0, 15], sizes = [4, 241], strides = [1, 1]} : vector<4x256xf32> to vector<4x241xf32>
    %59 = vector.extract_strided_slice %16 {offsets = [0, 0], sizes = [4, 15], strides = [1, 1]} : vector<4x256xf32> to vector<4x15xf32>
    %60 = tpu.concatenate %58, %59 in 1 : vector<4x241xf32>, vector<4x15xf32> -> vector<4x256xf32>
    %cst_7 = arith.constant 0.000000e+00 : f32
    %61 = vector.shape_cast %13 : vector<1x256xi1> to vector<1x256xi1>
    %62 = vector.broadcast %61 : vector<1x256xi1> to vector<4x256xi1>
    %63 = vector.broadcast %cst_7 : f32 to vector<4x256xf32>
    %64 = arith.select %62, %60, %63 : vector<4x256xi1>, vector<4x256xf32>
    %65 = arith.truncf %64 : vector<4x256xf32> to vector<4x256xbf16>
    %66 = vector.extract_strided_slice %16 {offsets = [0, 16], sizes = [4, 240], strides = [1, 1]} : vector<4x256xf32> to vector<4x240xf32>
    %67 = vector.extract_strided_slice %16 {offsets = [0, 0], sizes = [4, 16], strides = [1, 1]} : vector<4x256xf32> to vector<4x16xf32>
    %68 = tpu.concatenate %66, %67 in 1 : vector<4x240xf32>, vector<4x16xf32> -> vector<4x256xf32>
    %cst_8 = arith.constant 0.000000e+00 : f32
    %69 = vector.shape_cast %6 : vector<1x256xi1> to vector<1x256xi1>
    %70 = vector.broadcast %69 : vector<1x256xi1> to vector<4x256xi1>
    %71 = vector.broadcast %cst_8 : f32 to vector<4x256xf32>
    %72 = arith.select %70, %68, %71 : vector<4x256xi1>, vector<4x256xf32>
    %73 = arith.truncf %72 : vector<4x256xf32> to vector<4x256xbf16>
    %74 = vector.extract_strided_slice %16 {offsets = [0, 17], sizes = [4, 239], strides = [1, 1]} : vector<4x256xf32> to vector<4x239xf32>
    %75 = vector.extract_strided_slice %16 {offsets = [0, 0], sizes = [4, 17], strides = [1, 1]} : vector<4x256xf32> to vector<4x17xf32>
    %76 = tpu.concatenate %74, %75 in 1 : vector<4x239xf32>, vector<4x17xf32> -> vector<4x256xf32>
    %cst_9 = arith.constant 0.000000e+00 : f32
    %77 = vector.shape_cast %14 : vector<1x256xi1> to vector<1x256xi1>
    %78 = vector.broadcast %77 : vector<1x256xi1> to vector<4x256xi1>
    %79 = vector.broadcast %cst_9 : f32 to vector<4x256xf32>
    %80 = arith.select %78, %76, %79 : vector<4x256xi1>, vector<4x256xf32>
    %81 = arith.truncf %80 : vector<4x256xf32> to vector<4x256xbf16>
    %82 = tpu.concatenate %24, %32, %40, %48, %49, %57, %65, %73, %81 in 0 : vector<4x256xbf16>, vector<4x256xbf16>, vector<4x256xbf16>, vector<4x256xbf16>, vector<4x256xbf16>, vector<4x256xbf16>, vector<4x256xbf16>, vector<4x256xbf16>, vector<4x256xbf16> -> vector<36x256xbf16>
    %c1 = arith.constant 1 : index
    %c0_10 = arith.constant 0 : index
    %c0_11 = arith.constant 0 : index
    %83 = vector.load %arg1[%c1, %c0_10, %c0_11] : memref<2x4x256xf32, #tpu.memory_space<vmem>>, vector<1x4x256xf32>
    %84 = vector.shape_cast %83 : vector<1x4x256xf32> to vector<4x256xf32>
    %85 = vector.extract_strided_slice %84 {offsets = [0, 239], sizes = [4, 17], strides = [1, 1]} : vector<4x256xf32> to vector<4x17xf32>
    %86 = vector.extract_strided_slice %84 {offsets = [0, 0], sizes = [4, 239], strides = [1, 1]} : vector<4x256xf32> to vector<4x239xf32>
    %87 = tpu.concatenate %85, %86 in 1 : vector<4x17xf32>, vector<4x239xf32> -> vector<4x256xf32>
    %cst_12 = arith.constant 0.000000e+00 : f32
    %88 = vector.shape_cast %11 : vector<1x256xi1> to vector<1x256xi1>
    %89 = vector.broadcast %88 : vector<1x256xi1> to vector<4x256xi1>
    %90 = vector.broadcast %cst_12 : f32 to vector<4x256xf32>
    %91 = arith.select %89, %87, %90 : vector<4x256xi1>, vector<4x256xf32>
    %92 = arith.truncf %91 : vector<4x256xf32> to vector<4x256xbf16>
    %93 = vector.extract_strided_slice %84 {offsets = [0, 240], sizes = [4, 16], strides = [1, 1]} : vector<4x256xf32> to vector<4x16xf32>
    %94 = vector.extract_strided_slice %84 {offsets = [0, 0], sizes = [4, 240], strides = [1, 1]} : vector<4x256xf32> to vector<4x240xf32>
    %95 = tpu.concatenate %93, %94 in 1 : vector<4x16xf32>, vector<4x240xf32> -> vector<4x256xf32>
    %cst_13 = arith.constant 0.000000e+00 : f32
    %96 = vector.shape_cast %4 : vector<1x256xi1> to vector<1x256xi1>
    %97 = vector.broadcast %96 : vector<1x256xi1> to vector<4x256xi1>
    %98 = vector.broadcast %cst_13 : f32 to vector<4x256xf32>
    %99 = arith.select %97, %95, %98 : vector<4x256xi1>, vector<4x256xf32>
    %100 = arith.truncf %99 : vector<4x256xf32> to vector<4x256xbf16>
    %101 = vector.extract_strided_slice %84 {offsets = [0, 241], sizes = [4, 15], strides = [1, 1]} : vector<4x256xf32> to vector<4x15xf32>
    %102 = vector.extract_strided_slice %84 {offsets = [0, 0], sizes = [4, 241], strides = [1, 1]} : vector<4x256xf32> to vector<4x241xf32>
    %103 = tpu.concatenate %101, %102 in 1 : vector<4x15xf32>, vector<4x241xf32> -> vector<4x256xf32>
    %cst_14 = arith.constant 0.000000e+00 : f32
    %104 = vector.shape_cast %12 : vector<1x256xi1> to vector<1x256xi1>
    %105 = vector.broadcast %104 : vector<1x256xi1> to vector<4x256xi1>
    %106 = vector.broadcast %cst_14 : f32 to vector<4x256xf32>
    %107 = arith.select %105, %103, %106 : vector<4x256xi1>, vector<4x256xf32>
    %108 = arith.truncf %107 : vector<4x256xf32> to vector<4x256xbf16>
    %109 = vector.extract_strided_slice %84 {offsets = [0, 255], sizes = [4, 1], strides = [1, 1]} : vector<4x256xf32> to vector<4x1xf32>
    %110 = vector.extract_strided_slice %84 {offsets = [0, 0], sizes = [4, 255], strides = [1, 1]} : vector<4x256xf32> to vector<4x255xf32>
    %111 = tpu.concatenate %109, %110 in 1 : vector<4x1xf32>, vector<4x255xf32> -> vector<4x256xf32>
    %cst_15 = arith.constant 0.000000e+00 : f32
    %112 = vector.shape_cast %8 : vector<1x256xi1> to vector<1x256xi1>
    %113 = vector.broadcast %112 : vector<1x256xi1> to vector<4x256xi1>
    %114 = vector.broadcast %cst_15 : f32 to vector<4x256xf32>
    %115 = arith.select %113, %111, %114 : vector<4x256xi1>, vector<4x256xf32>
    %116 = arith.truncf %115 : vector<4x256xf32> to vector<4x256xbf16>
    %117 = arith.truncf %84 : vector<4x256xf32> to vector<4x256xbf16>
    %118 = vector.extract_strided_slice %84 {offsets = [0, 1], sizes = [4, 255], strides = [1, 1]} : vector<4x256xf32> to vector<4x255xf32>
    %119 = vector.extract_strided_slice %84 {offsets = [0, 0], sizes = [4, 1], strides = [1, 1]} : vector<4x256xf32> to vector<4x1xf32>
    %120 = tpu.concatenate %118, %119 in 1 : vector<4x255xf32>, vector<4x1xf32> -> vector<4x256xf32>
    %cst_16 = arith.constant 0.000000e+00 : f32
    %121 = vector.shape_cast %10 : vector<1x256xi1> to vector<1x256xi1>
    %122 = vector.broadcast %121 : vector<1x256xi1> to vector<4x256xi1>
    %123 = vector.broadcast %cst_16 : f32 to vector<4x256xf32>
    %124 = arith.select %122, %120, %123 : vector<4x256xi1>, vector<4x256xf32>
    %125 = arith.truncf %124 : vector<4x256xf32> to vector<4x256xbf16>
    %126 = vector.extract_strided_slice %84 {offsets = [0, 15], sizes = [4, 241], strides = [1, 1]} : vector<4x256xf32> to vector<4x241xf32>
    %127 = vector.extract_strided_slice %84 {offsets = [0, 0], sizes = [4, 15], strides = [1, 1]} : vector<4x256xf32> to vector<4x15xf32>
    %128 = tpu.concatenate %126, %127 in 1 : vector<4x241xf32>, vector<4x15xf32> -> vector<4x256xf32>
    %cst_17 = arith.constant 0.000000e+00 : f32
    %129 = vector.shape_cast %13 : vector<1x256xi1> to vector<1x256xi1>
    %130 = vector.broadcast %129 : vector<1x256xi1> to vector<4x256xi1>
    %131 = vector.broadcast %cst_17 : f32 to vector<4x256xf32>
    %132 = arith.select %130, %128, %131 : vector<4x256xi1>, vector<4x256xf32>
    %133 = arith.truncf %132 : vector<4x256xf32> to vector<4x256xbf16>
    %134 = vector.extract_strided_slice %84 {offsets = [0, 16], sizes = [4, 240], strides = [1, 1]} : vector<4x256xf32> to vector<4x240xf32>
    %135 = vector.extract_strided_slice %84 {offsets = [0, 0], sizes = [4, 16], strides = [1, 1]} : vector<4x256xf32> to vector<4x16xf32>
    %136 = tpu.concatenate %134, %135 in 1 : vector<4x240xf32>, vector<4x16xf32> -> vector<4x256xf32>
    %cst_18 = arith.constant 0.000000e+00 : f32
    %137 = vector.shape_cast %6 : vector<1x256xi1> to vector<1x256xi1>
    %138 = vector.broadcast %137 : vector<1x256xi1> to vector<4x256xi1>
    %139 = vector.broadcast %cst_18 : f32 to vector<4x256xf32>
    %140 = arith.select %138, %136, %139 : vector<4x256xi1>, vector<4x256xf32>
    %141 = arith.truncf %140 : vector<4x256xf32> to vector<4x256xbf16>
    %142 = vector.extract_strided_slice %84 {offsets = [0, 17], sizes = [4, 239], strides = [1, 1]} : vector<4x256xf32> to vector<4x239xf32>
    %143 = vector.extract_strided_slice %84 {offsets = [0, 0], sizes = [4, 17], strides = [1, 1]} : vector<4x256xf32> to vector<4x17xf32>
    %144 = tpu.concatenate %142, %143 in 1 : vector<4x239xf32>, vector<4x17xf32> -> vector<4x256xf32>
    %cst_19 = arith.constant 0.000000e+00 : f32
    %145 = vector.shape_cast %14 : vector<1x256xi1> to vector<1x256xi1>
    %146 = vector.broadcast %145 : vector<1x256xi1> to vector<4x256xi1>
    %147 = vector.broadcast %cst_19 : f32 to vector<4x256xf32>
    %148 = arith.select %146, %144, %147 : vector<4x256xi1>, vector<4x256xf32>
    %149 = arith.truncf %148 : vector<4x256xf32> to vector<4x256xbf16>
    %150 = tpu.concatenate %92, %100, %108, %116, %117, %125, %133, %141, %149 in 0 : vector<4x256xbf16>, vector<4x256xbf16>, vector<4x256xbf16>, vector<4x256xbf16>, vector<4x256xbf16>, vector<4x256xbf16>, vector<4x256xbf16>, vector<4x256xbf16>, vector<4x256xbf16> -> vector<36x256xbf16>
    %151 = tpu.concatenate %82, %150 in 1 : vector<36x256xbf16>, vector<36x256xbf16> -> vector<36x512xbf16>
    %c0_20 = arith.constant 0 : index
    %c0_21 = arith.constant 0 : index
    %152 = vector.load %arg2[%c0_20, %c0_21] : memref<8x36xbf16, #tpu.memory_space<vmem>>, vector<8x36xbf16>
    %cst_22 = arith.constant dense<0.000000e+00> : vector<8x512xf32>
    %153 = tpu.matmul %152, %151, %cst_22 {dimension_numbers = #tpu.dot_dimension_numbers<[1], [0], [0], [1], [0, 0, 1, 1], [], []>} : vector<8x36xbf16>, vector<36x512xbf16>, vector<8x512xf32> -> vector<8x512xf32>
    %154 = vector.extract_strided_slice %153 {offsets = [0, 0], sizes = [4, 512], strides = [1, 1]} : vector<8x512xf32> to vector<4x512xf32>
    %c0_23 = arith.constant 0 : index
    %c0_24 = arith.constant 0 : index
    %155 = vector.load %arg3[%c0_23, %c0_24] : memref<4x1xf32, #tpu.memory_space<vmem>>, vector<4x1xf32>
    %156 = vector.broadcast %155 : vector<4x1xf32> to vector<4x512xf32>
    %157 = arith.addf %154, %156 : vector<4x512xf32>
    %cst_25 = arith.constant 0.000000e+00 : f32
    %158 = vector.broadcast %cst_25 : f32 to vector<4x512xf32>
    %159 = arith.maximumf %157, %158 : vector<4x512xf32>
    %160 = vector.extract_strided_slice %153 {offsets = [4, 0], sizes = [4, 512], strides = [1, 1]} : vector<8x512xf32> to vector<4x512xf32>
    %c0_26 = arith.constant 0 : index
    %c0_27 = arith.constant 0 : index
    %161 = vector.load %arg4[%c0_26, %c0_27] : memref<4x1xf32, #tpu.memory_space<vmem>>, vector<4x1xf32>
    %162 = vector.broadcast %161 : vector<4x1xf32> to vector<4x512xf32>
    %163 = arith.addf %160, %162 : vector<4x512xf32>
    %cst_28 = arith.constant 0.000000e+00 : f32
    %164 = vector.broadcast %cst_28 : f32 to vector<4x512xf32>
    %165 = arith.maximumf %163, %164 : vector<4x512xf32>
    %166 = arith.addf %159, %165 : vector<4x512xf32>
    %167 = vector.extract_strided_slice %166 {offsets = [0, 0], sizes = [4, 256], strides = [1, 1]} : vector<4x512xf32> to vector<4x256xf32>
    %c0_29 = arith.constant 0 : index
    %c0_30 = arith.constant 0 : index
    %c0_31 = arith.constant 0 : index
    %168 = vector.load %arg5[%c0_29, %c0_30, %c0_31] : memref<2x4x256xf32, #tpu.memory_space<vmem>>, vector<1x4x256xf32>
    %169 = vector.shape_cast %168 : vector<1x4x256xf32> to vector<4x256xf32>
    %170 = vector.shape_cast %167 : vector<4x256xf32> to vector<1x4x256xf32>
    tpu.vector_store %arg5[%c0_29, %c0_30, %c0_31], %170 {strides = array<i32>} : memref<2x4x256xf32, #tpu.memory_space<vmem>>, vector<1x4x256xf32>,
    %171 = vector.extract_strided_slice %166 {offsets = [0, 256], sizes = [4, 256], strides = [1, 1]} : vector<4x512xf32> to vector<4x256xf32>
    %c1_32 = arith.constant 1 : index
    %c0_33 = arith.constant 0 : index
    %c0_34 = arith.constant 0 : index
    %172 = vector.load %arg5[%c1_32, %c0_33, %c0_34] : memref<2x4x256xf32, #tpu.memory_space<vmem>>, vector<1x4x256xf32>
    %173 = vector.shape_cast %172 : vector<1x4x256xf32> to vector<4x256xf32>
    %174 = vector.shape_cast %171 : vector<4x256xf32> to vector<1x4x256xf32>
    tpu.vector_store %arg5[%c1_32, %c0_33, %c0_34], %174 {strides = array<i32>} : memref<2x4x256xf32, #tpu.memory_space<vmem>>, vector<1x4x256xf32>,
    return
  }
  func.func @transform_0(%arg0: i32) -> (i32, i32, i32) {
    %c0_i32 = arith.constant 0 : i32
    %c0_i32_0 = arith.constant 0 : i32
    %c0_i32_1 = arith.constant 0 : i32
    return %arg0, %c0_i32, %c0_i32_0 : i32, i32, i32
  }
  func.func @transform_1(%arg0: i32) -> (i32, i32) {
    %c0_i32 = arith.constant 0 : i32
    %c0_i32_0 = arith.constant 0 : i32
    %c0_i32_1 = arith.constant 0 : i32
    return %c0_i32, %c0_i32_0 : i32, i32
  }
  func.func @transform_2(%arg0: i32) -> (i32, i32) {
    %c0_i32 = arith.constant 0 : i32
    %c0_i32_0 = arith.constant 0 : i32
    %c0_i32_1 = arith.constant 0 : i32
    return %c0_i32, %c0_i32_0 : i32, i32
  }
  func.func @transform_3(%arg0: i32) -> (i32, i32) {
    %c0_i32 = arith.constant 0 : i32
    %c0_i32_0 = arith.constant 0 : i32
    %c0_i32_1 = arith.constant 0 : i32
    return %c0_i32, %c0_i32_0 : i32, i32
  }
  func.func @transform_4(%arg0: i32) -> (i32, i32, i32) {
    %c0_i32 = arith.constant 0 : i32
    %c0_i32_0 = arith.constant 0 : i32
    %c0_i32_1 = arith.constant 0 : i32
    return %arg0, %c0_i32, %c0_i32_0 : i32, i32, i32
  }
}

</mosaic_0001>

<llo_original>
// kernel: tpu_custom_call.1
$region0: #{tpu_custom_call.1}
  #allocation0 [shape = 'u32[]', space=smem, size = 0x4, offset = 0x4, fixed_abs, tag = 'smem constant byte address 0x4 - core index']
  #allocation1 [shape = 'u32[144,128]{1,0:T(1,128)}', space=vmem, size = 0x12000, scoped, tag = 'internal scratch']
  %s0 = inlined_call_operand.hbm [shape: f32[2,4,256], index: 0, kind: input, shape index: {}]
  %s1 = inlined_call_operand.vmem [shape: bf16[8,36], index: 1, kind: input, shape index: {}]
  %s2 = inlined_call_operand.vmem [shape: f32[4,1], index: 2, kind: input, shape index: {}]
  %s3 = inlined_call_operand.vmem [shape: f32[4,1], index: 3, kind: input, shape index: {}]
  %s4 = inlined_call_operand.hbm [shape: f32[2,4,256], index: 4, kind: output, shape index: {}]
  %s5 = sld [smem:[#allocation0]]
  $region30: #{tpu_custom_call.1} parent=0
    _
  %s7 = ssub.s32 1, %s5
  %s8 = scalar_select 0, %s7, %s5
  $region1: #{tpu_custom_call.1} parent=0
    #allocation2 [shape = 'u8[8192]{0}', space=vmem, size = 0x2000, scoped, tag = 'input window, operand 0, single buffered']
    #allocation3 [shape = 's32[1]{0}', space=sflag, size = 0x4, scoped, tag = 'scoped memory for tpu_custom_call.1']
    #allocation4 [shape = 's32[1]{0}', space=sflag, size = 0x4, scoped, tag = 'scoped memory for tpu_custom_call.1']
    #allocation5 [shape = 'u8[8192]{0}', space=vmem, size = 0x2000, scoped, tag = 'output window, operand 0, single buffered']
    %9 = vsyncpa [#allocation3], 0
    %10 = vsyncpa [#allocation4], 0
    // Predicated region
    $region2: #{tpu_custom_call.1} parent=1 // pred_check
      _
    $region3: #{tpu_custom_call.1} parent=1 // pred_check_branch
      %12 = sbr.rel (0) target = $region5
    $region4: #{tpu_custom_call.1} parent=1 // pred_region
      %s14 = ssub.s32 256, 256
      %15 = vsyncadd [#allocation3], %s14
      %s16 = sshll.u32 [#allocation2], 4
      %s17 = int_to_ptr.vmem [resolvable:$true] %s16
      %22 = dma.hbm_to_vmem [thread:$0]  %s0, 256, %s17, [#allocation3], 128, 128, 8
    $region5: #{tpu_custom_call.1} parent=1 // pred_fallthru
      _
    // Predicated region
    $region6: #{tpu_custom_call.1} parent=1 // pred_check
      _
    $region7: #{tpu_custom_call.1} parent=1 // pred_check_branch
      %24 = sbr.rel (0) target = $region9
    $region8: #{tpu_custom_call.1} parent=1 // pred_region
      _
    $region9: #{tpu_custom_call.1} parent=1 // pred_fallthru
      _
    // Predicated region
    $region10: #{tpu_custom_call.1} parent=1 // pred_check
      _
    $region11: #{tpu_custom_call.1} parent=1 // pred_check_branch
      %26 = sbr.rel (0) target = $region13
    $region12: #{tpu_custom_call.1} parent=1 // pred_region
      _
    $region13: #{tpu_custom_call.1} parent=1 // pred_fallthru
      _
    // Predicated region
    $region14: #{tpu_custom_call.1} parent=1 // pred_check
      _
    $region15: #{tpu_custom_call.1} parent=1 // pred_check_branch
      %28 = sbr.rel (0) target = $region17
    $region16: #{tpu_custom_call.1} parent=1 // pred_region
      _
    $region17: #{tpu_custom_call.1} parent=1 // pred_fallthru
      _
    // Predicated region
    $region18: #{tpu_custom_call.1} parent=1 // pred_check
      _
    $region19: #{tpu_custom_call.1} parent=1 // pred_check_branch
      %30 = sbr.rel (0) target = $region21
    $region20: #{tpu_custom_call.1} parent=1 // pred_region
      %31 = dma.done [#allocation3], 256
    $region21: #{tpu_custom_call.1} parent=1 // pred_fallthru
      _
    %v33 = vlaneseq
    %v34 = vand.u32 %v33, 127
    %v35 = vadd.s32 %v34, 128
    %v36 = vand.u32 %v34, 15
    %v37 = vand.u32 %v35, 15
    %vm38 = vcmp.ge.s32.totalorder %v34, 16
    %vm39 = vcmp.ge.s32.totalorder %v35, 16
    %vm40 = vcmp.lt.s32.totalorder %v34, 240
    %vm41 = vcmp.lt.s32.totalorder %v35, 240
    %vm42 = vcmp.ge.s32.totalorder %v36, 1
    %vm43 = vcmp.ge.s32.totalorder %v37, 1
    %vm44 = vcmp.lt.s32.totalorder %v36, 15
    %vm45 = vcmp.lt.s32.totalorder %v37, 15
    %vm46 = vmand %vm38, %vm42
    %vm47 = vmand %vm39, %vm43
    %vm48 = vmand %vm38, %vm44
    %vm49 = vmand %vm39, %vm45
    %vm50 = vmand %vm40, %vm42
    %vm51 = vmand %vm41, %vm43
    %vm52 = vmand %vm40, %vm44
    %vm53 = vmand %vm41, %vm45
    %v54 = vld [vmem:[#allocation2] sm:$0xff]
    %v56 = vcombine.high %v54, %v54
    %57 = vrot.lane.b32.xlu0 %v56, 17
    %v58 = vpop.permute.xlu0 %57
    %60 = vrot.lane.b32.xlu0 %v54, 17
    %v61 = vpop.permute.xlu0 %60
    %vm62 = vcmask 138240
    %v63 = vsel %vm62, %v61, %v58
    %v66 = vsel %vm62, %v58, %v61
    %v67 = vsel %vm46, 1, 0
    %v68 = vsel %vm47, 1, 0
    %vm69 = vcmp.eq.s32.totalorder %v67, 1
    %vm70 = vcmp.eq.s32.totalorder %v68, 1
    %v71 = vsel %vm69, %v66, 0.0
    %v72 = vsel %vm70, %v63, 0.0
    %v73 = vpack.c.bf16 %v71, %v71
    %v74 = vpack.c.bf16 %v72, %v72
    %75 = vrot.lane.b32.xlu0 %v56, 16
    %v76 = vpop.permute.xlu0 %75
    %78 = vrot.lane.b32.xlu0 %v54, 16
    %v79 = vpop.permute.xlu0 %78
    %vm80 = vcmask 130048
    %v81 = vsel %vm80, %v79, %v76
    %v84 = vsel %vm80, %v76, %v79
    %v85 = vsel %vm38, 1, 0
    %v86 = vsel %vm39, 1, 0
    %vm87 = vcmp.eq.s32.totalorder %v85, 1
    %vm88 = vcmp.eq.s32.totalorder %v86, 1
    %v89 = vsel %vm87, %v84, 0.0
    %v90 = vsel %vm88, %v81, 0.0
    %v91 = vpack.c.bf16 %v89, %v89
    %v92 = vpack.c.bf16 %v90, %v90
    %93 = vrot.lane.b32.xlu0 %v56, 15
    %v94 = vpop.permute.xlu0 %93
    %96 = vrot.lane.b32.xlu0 %v54, 15
    %v97 = vpop.permute.xlu0 %96
    %vm98 = vcmask 121856
    %v99 = vsel %vm98, %v97, %v94
    %v102 = vsel %vm98, %v94, %v97
    %v103 = vsel %vm48, 1, 0
    %v104 = vsel %vm49, 1, 0
    %vm105 = vcmp.eq.s32.totalorder %v103, 1
    %vm106 = vcmp.eq.s32.totalorder %v104, 1
    %v107 = vsel %vm105, %v102, 0.0
    %v108 = vsel %vm106, %v99, 0.0
    %v109 = vpack.c.bf16 %v107, %v107
    %v110 = vpack.c.bf16 %v108, %v108
    %111 = vrot.lane.b32.xlu0 %v56, 1
    %v112 = vpop.permute.xlu0 %111
    %114 = vrot.lane.b32.xlu0 %v54, 1
    %v115 = vpop.permute.xlu0 %114
    %vm116 = vcmask 7168
    %v117 = vsel %vm116, %v115, %v112
    %v120 = vsel %vm116, %v112, %v115
    %v121 = vsel %vm42, 1, 0
    %v122 = vsel %vm43, 1, 0
    %vm123 = vcmp.eq.s32.totalorder %v121, 1
    %vm124 = vcmp.eq.s32.totalorder %v122, 1
    %v125 = vsel %vm123, %v120, 0.0
    %v126 = vsel %vm124, %v117, 0.0
    %v127 = vpack.c.bf16 %v125, %v125
    %v128 = vpack.c.bf16 %v126, %v126
    %v130 = vpack.c.bf16 %v54, %v54
    %v131 = vpack.c.bf16 %v56, %v56
    %132 = vrot.lane.b32.xlu0 %v54, 127
    %v133 = vpop.permute.xlu0 %132
    %134 = vrot.lane.b32.xlu0 %v56, 127
    %v135 = vpop.permute.xlu0 %134
    %vm136 = vcmask 1039360
    %v137 = vsel %vm136, %v133, %v135
    %v141 = vsel %vm136, %v135, %v133
    %v142 = vsel %vm44, 1, 0
    %v143 = vsel %vm45, 1, 0
    %vm144 = vcmp.eq.s32.totalorder %v142, 1
    %vm145 = vcmp.eq.s32.totalorder %v143, 1
    %v146 = vsel %vm144, %v137, 0.0
    %v147 = vsel %vm145, %v141, 0.0
    %v148 = vpack.c.bf16 %v146, %v146
    %v149 = vpack.c.bf16 %v147, %v147
    %150 = vrot.lane.b32.xlu0 %v54, 113
    %v151 = vpop.permute.xlu0 %150
    %152 = vrot.lane.b32.xlu0 %v56, 113
    %v153 = vpop.permute.xlu0 %152
    %vm154 = vcmask 924672
    %v155 = vsel %vm154, %v151, %v153
    %v159 = vsel %vm154, %v153, %v151
    %v160 = vsel %vm50, 1, 0
    %v161 = vsel %vm51, 1, 0
    %vm162 = vcmp.eq.s32.totalorder %v160, 1
    %vm163 = vcmp.eq.s32.totalorder %v161, 1
    %v164 = vsel %vm162, %v155, 0.0
    %v165 = vsel %vm163, %v159, 0.0
    %v166 = vpack.c.bf16 %v164, %v164
    %v167 = vpack.c.bf16 %v165, %v165
    %168 = vrot.lane.b32.xlu0 %v54, 112
    %v169 = vpop.permute.xlu0 %168
    %170 = vrot.lane.b32.xlu0 %v56, 112
    %v171 = vpop.permute.xlu0 %170
    %vm172 = vcmask 916480
    %v173 = vsel %vm172, %v169, %v171
    %v177 = vsel %vm172, %v171, %v169
    %v178 = vsel %vm40, 1, 0
    %v179 = vsel %vm41, 1, 0
    %vm180 = vcmp.eq.s32.totalorder %v178, 1
    %vm181 = vcmp.eq.s32.totalorder %v179, 1
    %v182 = vsel %vm180, %v173, 0.0
    %v183 = vsel %vm181, %v177, 0.0
    %v184 = vpack.c.bf16 %v182, %v182
    %v185 = vpack.c.bf16 %v183, %v183
    %186 = vrot.lane.b32.xlu0 %v54, 111
    %v187 = vpop.permute.xlu0 %186
    %188 = vrot.lane.b32.xlu0 %v56, 111
    %v189 = vpop.permute.xlu0 %188
    %vm190 = vcmask 908288
    %v191 = vsel %vm190, %v187, %v189
    %v195 = vsel %vm190, %v189, %v187
    %v196 = vsel %vm52, 1, 0
    %v197 = vsel %vm53, 1, 0
    %vm198 = vcmp.eq.s32.totalorder %v196, 1
    %vm199 = vcmp.eq.s32.totalorder %v197, 1
    %v200 = vsel %vm198, %v191, 0.0
    %v201 = vsel %vm199, %v195, 0.0
    %v202 = vpack.c.bf16 %v200, %v200
    %v203 = vpack.c.bf16 %v201, %v201
    %v206 = vrot.slane %v91, 6
    %v207 = vrot.slane %v92, 6
    %v210 = vrot.slane %v109, 4
    %v211 = vrot.slane %v110, 4
    %v214 = vrot.slane %v127, 2
    %v215 = vrot.slane %v128, 2
    %v218 = vrot.slane %v148, 6
    %v219 = vrot.slane %v149, 6
    %v222 = vrot.slane %v166, 4
    %v223 = vrot.slane %v167, 4
    %v226 = vrot.slane %v184, 2
    %v227 = vrot.slane %v185, 2
    %vm228 = vcmask 1041408
    %v231 = vsel %vm228, %v73, %v206
    %v234 = vsel %vm228, %v74, %v207
    %vm235 = vcmask 1043456
    %v237 = vsel %vm235, %v231, %v210
    %v239 = vsel %vm235, %v234, %v211
    %vm240 = vcmask 1045504
    %v242 = vsel %vm240, %v237, %v214
    %v245 = vsel %vm240, %v239, %v215
    %v249 = vsel %vm228, %v130, %v218
    %v252 = vsel %vm228, %v131, %v219
    %v254 = vsel %vm235, %v249, %v222
    %v256 = vsel %vm235, %v252, %v223
    %v258 = vsel %vm240, %v254, %v226
    %v261 = vsel %vm240, %v256, %v227
    %s263 = scalar_lea.vmem [#allocation2], 8
    %v264 = vld [vmem:[%s263] sm:$0xff]
    %v266 = vcombine.high %v264, %v264
    %267 = vrot.lane.b32.xlu0 %v266, 17
    %v268 = vpop.permute.xlu0 %267
    %270 = vrot.lane.b32.xlu0 %v264, 17
    %v271 = vpop.permute.xlu0 %270
    %v272 = vsel %vm62, %v271, %v268
    %v275 = vsel %vm62, %v268, %v271
    %v276 = vsel %vm69, %v275, 0.0
    %v277 = vsel %vm70, %v272, 0.0
    %v278 = vpack.c.bf16 %v276, %v276
    %v279 = vpack.c.bf16 %v277, %v277
    %280 = vrot.lane.b32.xlu0 %v266, 16
    %v281 = vpop.permute.xlu0 %280
    %283 = vrot.lane.b32.xlu0 %v264, 16
    %v284 = vpop.permute.xlu0 %283
    %v285 = vsel %vm80, %v284, %v281
    %v288 = vsel %vm80, %v281, %v284
    %v289 = vsel %vm87, %v288, 0.0
    %v290 = vsel %vm88, %v285, 0.0
    %v291 = vpack.c.bf16 %v289, %v289
    %v292 = vpack.c.bf16 %v290, %v290
    %293 = vrot.lane.b32.xlu0 %v266, 15
    %v294 = vpop.permute.xlu0 %293
    %296 = vrot.lane.b32.xlu0 %v264, 15
    %v297 = vpop.permute.xlu0 %296
    %v298 = vsel %vm98, %v297, %v294
    %v301 = vsel %vm98, %v294, %v297
    %v302 = vsel %vm105, %v301, 0.0
    %v303 = vsel %vm106, %v298, 0.0
    %v304 = vpack.c.bf16 %v302, %v302
    %v305 = vpack.c.bf16 %v303, %v303
    %306 = vrot.lane.b32.xlu0 %v266, 1
    %v307 = vpop.permute.xlu0 %306
    %309 = vrot.lane.b32.xlu0 %v264, 1
    %v310 = vpop.permute.xlu0 %309
    %v311 = vsel %vm116, %v310, %v307
    %v314 = vsel %vm116, %v307, %v310
    %v315 = vsel %vm123, %v314, 0.0
    %v316 = vsel %vm124, %v311, 0.0
    %v317 = vpack.c.bf16 %v315, %v315
    %v318 = vpack.c.bf16 %v316, %v316
    %v320 = vpack.c.bf16 %v264, %v264
    %v321 = vpack.c.bf16 %v266, %v266
    %322 = vrot.lane.b32.xlu0 %v264, 127
    %v323 = vpop.permute.xlu0 %322
    %324 = vrot.lane.b32.xlu0 %v266, 127
    %v325 = vpop.permute.xlu0 %324
    %v326 = vsel %vm136, %v323, %v325
    %v330 = vsel %vm136, %v325, %v323
    %v331 = vsel %vm144, %v326, 0.0
    %v332 = vsel %vm145, %v330, 0.0
    %v333 = vpack.c.bf16 %v331, %v331
    %v334 = vpack.c.bf16 %v332, %v332
    %335 = vrot.lane.b32.xlu0 %v264, 113
    %v336 = vpop.permute.xlu0 %335
    %337 = vrot.lane.b32.xlu0 %v266, 113
    %v338 = vpop.permute.xlu0 %337
    %v339 = vsel %vm154, %v336, %v338
    %v343 = vsel %vm154, %v338, %v336
    %v344 = vsel %vm162, %v339, 0.0
    %v345 = vsel %vm163, %v343, 0.0
    %v346 = vpack.c.bf16 %v344, %v344
    %v347 = vpack.c.bf16 %v345, %v345
    %348 = vrot.lane.b32.xlu0 %v264, 112
    %v349 = vpop.permute.xlu0 %348
    %350 = vrot.lane.b32.xlu0 %v266, 112
    %v351 = vpop.permute.xlu0 %350
    %v352 = vsel %vm172, %v349, %v351
    %v356 = vsel %vm172, %v351, %v349
    %v357 = vsel %vm180, %v352, 0.0
    %v358 = vsel %vm181, %v356, 0.0
    %v359 = vpack.c.bf16 %v357, %v357
    %v360 = vpack.c.bf16 %v358, %v358
    %361 = vrot.lane.b32.xlu0 %v264, 111
    %v362 = vpop.permute.xlu0 %361
    %363 = vrot.lane.b32.xlu0 %v266, 111
    %v364 = vpop.permute.xlu0 %363
    %v365 = vsel %vm190, %v362, %v364
    %v369 = vsel %vm190, %v364, %v362
    %v370 = vsel %vm198, %v365, 0.0
    %v371 = vsel %vm199, %v369, 0.0
    %v372 = vpack.c.bf16 %v370, %v370
    %v373 = vpack.c.bf16 %v371, %v371
    %v376 = vrot.slane %v291, 6
    %v377 = vrot.slane %v292, 6
    %v380 = vrot.slane %v304, 4
    %v381 = vrot.slane %v305, 4
    %v384 = vrot.slane %v317, 2
    %v385 = vrot.slane %v318, 2
    %v388 = vrot.slane %v333, 6
    %v389 = vrot.slane %v334, 6
    %v392 = vrot.slane %v346, 4
    %v393 = vrot.slane %v347, 4
    %v396 = vrot.slane %v359, 2
    %v397 = vrot.slane %v360, 2
    %v400 = vsel %vm228, %v278, %v376
    %v403 = vsel %vm228, %v279, %v377
    %v405 = vsel %vm235, %v400, %v380
    %v407 = vsel %vm235, %v403, %v381
    %v409 = vsel %vm240, %v405, %v384
    %v412 = vsel %vm240, %v407, %v385
    %v416 = vsel %vm228, %v320, %v388
    %v419 = vsel %vm228, %v321, %v389
    %v421 = vsel %vm235, %v416, %v392
    %v423 = vsel %vm235, %v419, %v393
    %v425 = vsel %vm240, %v421, %v396
    %v428 = vsel %vm240, %v423, %v397
    %v430 = vld [vmem:[%s1] sm:$0xf]
    %vm431 = vcmask 293888
    %v433 = vsel %vm431, %v430, 0
    %v436 = vsel %vm228, %v202, 0
    %v439 = vsel %vm228, %v203, 0
    %v442 = vsel %vm228, %v372, 0
    %v445 = vsel %vm228, %v373, 0
    %447 = vmatprep.subr.bf16.mxu0 0
    %448 = vmatpush1.bf16.msra.mxu0 0
    %449 = vmatprep.subr.bf16.mxu0 0
    %450 = vmatpush1.bf16.msra.mxu0 0
    %451 = vmatprep.subr.bf16.mxu0 0
    %452 = vmatpush1.bf16.msra.mxu0 0
    %453 = vmatprep.subr.bf16.mxu0 0
    %454 = vmatpush1.bf16.msra.mxu0 0
    %455 = vmatprep.subr.bf16.mxu0 0
    %456 = vmatpush1.bf16.msra.mxu0 0
    %457 = vmatprep.subr.bf16.mxu0 %v439
    %458 = vmatpush1.bf16.msra.mxu0 %v436
    %459 = vmatprep.subr.bf16.mxu0 %v261
    %460 = vmatpush1.bf16.msra.mxu0 %v258
    %461 = vmatprep.subr.bf16.mxu0 %v245
    %462 = vmatpush1.bf16.msra.mxu0 %v242
    %463 = vmatprep.subr.bf16.mxu0 0
    %464 = vmatpush2.bf16.msra.mxu0 0
    %465 = vmatprep.subr.bf16.mxu0 0
    %466 = vmatpush2.bf16.msra.mxu0 0
    %467 = vmatprep.subr.bf16.mxu0 0
    %468 = vmatpush2.bf16.msra.mxu0 0
    %469 = vmatprep.subr.bf16.mxu0 0
    %470 = vmatpush2.bf16.msra.mxu0 0
    %471 = vmatprep.subr.bf16.mxu0 0
    %472 = vmatpush2.bf16.msra.mxu0 0
    %473 = vmatprep.subr.bf16.mxu0 0
    %474 = vmatpush2.bf16.msra.mxu0 0
    %475 = vmatprep.subr.bf16.mxu0 0
    %476 = vmatpush2.bf16.msra.mxu0 0
    %477 = vmatprep.subr.bf16.mxu0 0
    %478 = vmatpush2.bf16.msra.mxu0 0
    %479 = vmatprep.mubr.bf16.mxu0 0
    %480 = vmatmul.mubr.bf16.gmra.mxu0 %v433
    %v481 = vpop.f32.mrf.mxu0
    %v482 = vadd.f32 0.0, %v481
    %v483 = vpop.f32.mrf.mxu0
    %v484 = vadd.f32 0.0, %v483
    %v485 = vpop.f32.mrf.mxu0
    %v486 = vpop.f32.mrf.mxu0
    %487 = vdwg.mxu0
    %488 = vmatprep.subr.bf16.mxu0 0
    %489 = vmatpush1.bf16.msra.mxu0 0
    %490 = vmatprep.subr.bf16.mxu0 0
    %491 = vmatpush1.bf16.msra.mxu0 0
    %492 = vmatprep.subr.bf16.mxu0 0
    %493 = vmatpush1.bf16.msra.mxu0 0
    %494 = vmatprep.subr.bf16.mxu0 0
    %495 = vmatpush1.bf16.msra.mxu0 0
    %496 = vmatprep.subr.bf16.mxu0 0
    %497 = vmatpush1.bf16.msra.mxu0 0
    %498 = vmatprep.subr.bf16.mxu0 %v445
    %499 = vmatpush1.bf16.msra.mxu0 %v442
    %500 = vmatprep.subr.bf16.mxu0 %v428
    %501 = vmatpush1.bf16.msra.mxu0 %v425
    %502 = vmatprep.subr.bf16.mxu0 %v412
    %503 = vmatpush1.bf16.msra.mxu0 %v409
    %504 = vmatprep.subr.bf16.mxu0 0
    %505 = vmatpush2.bf16.msra.mxu0 0
    %506 = vmatprep.subr.bf16.mxu0 0
    %507 = vmatpush2.bf16.msra.mxu0 0
    %508 = vmatprep.subr.bf16.mxu0 0
    %509 = vmatpush2.bf16.msra.mxu0 0
    %510 = vmatprep.subr.bf16.mxu0 0
    %511 = vmatpush2.bf16.msra.mxu0 0
    %512 = vmatprep.subr.bf16.mxu0 0
    %513 = vmatpush2.bf16.msra.mxu0 0
    %514 = vmatprep.subr.bf16.mxu0 0
    %515 = vmatpush2.bf16.msra.mxu0 0
    %516 = vmatprep.subr.bf16.mxu0 0
    %517 = vmatpush2.bf16.msra.mxu0 0
    %518 = vmatprep.subr.bf16.mxu0 0
    %519 = vmatpush2.bf16.msra.mxu0 0
    %520 = vmatprep.mubr.bf16.mxu0 0
    %521 = vmatmul.mubr.bf16.gmra.mxu0 %v433
    %v522 = vpop.f32.mrf.mxu0
    %v523 = vadd.f32 0.0, %v522
    %v524 = vpop.f32.mrf.mxu0
    %v525 = vadd.f32 0.0, %v524
    %v526 = vpop.f32.mrf.mxu0
    %v527 = vpop.f32.mrf.mxu0
    %528 = vdwg.mxu0
    %v529 = vld [vmem:[%s2] sm:$0xf]
    %531 = vset.pattern.permute.xlu0 0
    %532 = vperm.xlu0 %531, %v529
    %v533 = vpop.permute.xlu0 %532
    %v535 = vadd.f32 %v482, %v533
    %v536 = vadd.f32 %v484, %v533
    %v537 = vadd.f32 %v523, %v533
    %v538 = vadd.f32 %v525, %v533
    %v539 = vmax.f32 %v535, 0.0
    %v540 = vmax.f32 %v536, 0.0
    %v541 = vmax.f32 %v537, 0.0
    %v542 = vmax.f32 %v538, 0.0
    %v543 = vld [vmem:[%s3] sm:$0xf]
    %545 = vset.pattern.permute.xlu0 0
    %546 = vperm.xlu0 %545, %v543
    %v547 = vpop.permute.xlu0 %546
    %v548 = vrot.slane %v547, 4
    %v550 = vadd.f32 %v482, %v548
    %v551 = vadd.f32 %v484, %v548
    %v552 = vadd.f32 %v523, %v548
    %v553 = vadd.f32 %v525, %v548
    %v554 = vmax.f32 %v550, 0.0
    %v555 = vmax.f32 %v551, 0.0
    %v556 = vmax.f32 %v552, 0.0
    %v557 = vmax.f32 %v553, 0.0
    %v562 = vrot.slane %v554, 4
    %v563 = vrot.slane %v555, 4
    %v564 = vrot.slane %v556, 4
    %v565 = vrot.slane %v557, 4
    %v570 = vadd.f32 %v539, %v562
    %v571 = vadd.f32 %v540, %v563
    %v572 = vadd.f32 %v541, %v564
    %v573 = vadd.f32 %v542, %v565
    %v576 = vcombine.low %v570, %v571
    %578 = vst [vmem:[#allocation5] sm:$0xff] %v576
    %v581 = vcombine.low %v572, %v573
    %s583 = scalar_lea.vmem [#allocation5], 8
    %584 = vst [vmem:[%s583] sm:$0xff] %v581
    // Predicated region
    $region22: #{tpu_custom_call.1} parent=1 // pred_check
      _
    $region23: #{tpu_custom_call.1} parent=1 // pred_check_branch
      %586 = sbr.rel (0) target = $region25
    $region24: #{tpu_custom_call.1} parent=1 // pred_region
      %s588 = ssub.s32 256, 256
      %589 = vsyncadd [#allocation4], %s588
      %s590 = sshll.u32 [#allocation5], 4
      %s591 = int_to_ptr.vmem [resolvable:$true] %s590
      %596 = dma.vmem_to_hbm [thread:$0]  %s591, 256, %s4, [#allocation4], 128, 128, 8
    $region25: #{tpu_custom_call.1} parent=1 // pred_fallthru
      _
    // Predicated region
    $region26: #{tpu_custom_call.1} parent=1 // pred_check
      _
    $region27: #{tpu_custom_call.1} parent=1 // pred_check_branch
      %598 = sbr.rel (0) target = $region29
    $region28: #{tpu_custom_call.1} parent=1 // pred_region
      %599 = dma.done [#allocation4], 256
    $region29: #{tpu_custom_call.1} parent=1 // pred_fallthru
      _
    %600 = vsyncpa [#allocation3], 1
    %601 = vsyncpa [#allocation4], 1

</llo_original>
